<compile_context>
chip_gen: v5e
topology: v5e:2x2
jax: 0.10.0
libtpu: 0.0.40
codegen_flags: <defaults>
</compile_context>

<pallas_src>
import functools

import jax
import jax.numpy as jnp
from jax.experimental import pallas as pl
from jax.experimental.pallas import tpu as pltpu

N_MID_LAYERS = 8                  # conv2 .. conv9
N_CONVS = 1 + N_MID_LAYERS        # 9 GCNConv layers
N_WEIGHTS = N_CONVS + 2           # + lin1, lin2 = 11 stacked weight matrices
PAD_F = 128                       # lane-dense padding for features / hidden
SUBLANE = 16                      # bf16 min sublane tile -> node padding granularity


def gcn_kernel(num_nodes, adj_ref, x_ref, w_ref, b_ref, o_ref):
    """adj_ref:(pad_n,pad_n) f32, x_ref:(pad_n,PAD_F) bf16,
    w_ref:(11,PAD_F,PAD_F) bf16, b_ref:(11,PAD_F) f32, o_ref:(1,PAD_F) f32."""
    pad_n = adj_ref.shape[0]

    def gcn_conv(h_bf16, layer):
        # out = A_hat @ (H @ W) + b
        #   H@W   : bf16 MXU operands (K = 128), f32 accumulation
        #   A@HW  : f32 matmul (tiny K = pad_n), keeps A_hat exact
        #   bias + tanh in f32 (portable to v5e; no bf16 VPU/EUP there)
        w = w_ref[layer]                                     # (PAD_F, PAD_F) bf16
        b = b_ref[layer:layer + 1, :]                        # (1, PAD_F) f32
        hw = jnp.dot(h_bf16, w, preferred_element_type=jnp.float32)
        # Re-read adj each layer so its live range ends per conv (regalloc友).
        ahw = jnp.dot(adj_ref[...], hw, preferred_element_type=jnp.float32)
        return jnp.tanh(ahw + b)                             # (pad_n, PAD_F) f32

    # conv1 .. conv9 (statically unrolled)
    h = gcn_conv(x_ref[...], 0)
    for i in range(1, N_CONVS):
        h = gcn_conv(h.astype(jnp.bfloat16), i)

    # global_mean_pool(batch=None): exact f32 masked mean over the real node rows
    # (padded rows may hold tanh(bias) != 0, so mask them out explicitly).
    row = jax.lax.broadcasted_iota(jnp.int32, (pad_n, 1), 0)
    pool_w = jnp.where(row < num_nodes, 1.0 / num_nodes, 0.0)
    pooled = jnp.sum(h * pool_w, axis=0, keepdims=True)      # (1, PAD_F) f32

    # lin1 + tanh
    h1 = jnp.tanh(
        jnp.dot(pooled.astype(jnp.bfloat16), w_ref[N_CONVS],
                preferred_element_type=jnp.float32)
        + b_ref[N_CONVS:N_CONVS + 1, :])

    # lin2 + tanh (real output lives in column 0; padded columns stay tanh(0)=0)
    o_ref[...] = jnp.tanh(
        jnp.dot(h1.astype(jnp.bfloat16), w_ref[N_CONVS + 1],
                preferred_element_type=jnp.float32)
        + b_ref[N_CONVS + 1:N_CONVS + 2, :])


def build_normalized_adjacency(edge_index, num_nodes):
    """Dense GCN-normalized adjacency: D^{-1/2} (A + I) D^{-1/2}.

    Diagonal is forced to exactly 1 (add_remaining_self_loops semantics), so an
    edge_index that already contains self-loops does not double-count them.
    """
    src = edge_index[0]
    dst = edge_index[1]
    A = jnp.zeros((num_nodes, num_nodes), jnp.float32).at[dst, src].set(1.0)
    diag = jnp.arange(num_nodes)
    A = A.at[diag, diag].set(1.0)
    deg = jnp.sum(A, axis=1)
    dinv = jnp.where(deg > 0, 1.0 / jnp.sqrt(deg), 0.0)
    return dinv[:, None] * A * dinv[None, :]


def init_params(key, in_feats, hidden):
    """Logical (unpadded) parameters matching the PyTorch module shapes."""
    ks = jax.random.split(key, 6)

    def glorot(k, shape):
        fan_in, fan_out = shape[-2], shape[-1]
        scale = jnp.sqrt(6.0 / (fan_in + fan_out))
        return jax.random.uniform(k, shape, jnp.float32, -scale, scale)

    return {
        "w1": glorot(ks[0], (in_feats, hidden)),                  # conv1 weight
        "b1": jnp.zeros((1, hidden), jnp.float32),                # conv1 bias
        "ws": glorot(ks[1], (N_MID_LAYERS, hidden, hidden)),      # conv2..9 weights
        "bs": jnp.zeros((N_MID_LAYERS, 1, hidden), jnp.float32),  # conv2..9 biases
        "lw1": glorot(ks[2], (hidden, hidden)),                   # lin1 weight
        "lb1": glorot(ks[3], (1, hidden)),                        # lin1 bias
        "lw2": glorot(ks[4], (hidden, 1)),                        # lin2 weight
        "lb2": glorot(ks[5], (1, 1)),                             # lin2 bias
    }


def _pad_to(a, shape):
    """Zero-pad array `a` into the top-left corner of a zeros(shape) array."""
    out = jnp.zeros(shape, a.dtype)
    return out.at[tuple(slice(0, s) for s in a.shape)].set(a)


def prepare_params(params):
    """Pad + cast all weights/biases ONCE (hoisted out of the per-call path)."""
    in_f, hid = params["w1"].shape
    w = jnp.zeros((N_WEIGHTS, PAD_F, PAD_F), jnp.float32)
    w = w.at[0, :in_f, :hid].set(params["w1"])
    w = w.at[1:N_CONVS, :hid, :hid].set(params["ws"])
    w = w.at[N_CONVS, :hid, :hid].set(params["lw1"])
    w = w.at[N_CONVS + 1, :hid, :1].set(params["lw2"])

    b = jnp.zeros((N_WEIGHTS, PAD_F), jnp.float32)
    b = b.at[0, :hid].set(params["b1"][0])
    b = b.at[1:N_CONVS, :hid].set(params["bs"][:, 0, :])
    b = b.at[N_CONVS, :hid].set(params["lb1"][0])
    b = b.at[N_CONVS + 1, :1].set(params["lb2"][0])

    return {"w_stack": w.astype(jnp.bfloat16), "b_stack": b}


@jax.jit
def gcn_forward(x, edge_index, w_stack, b_stack):
    num_nodes = x.shape[0]
    pad_n = max(SUBLANE, ((num_nodes + SUBLANE - 1) // SUBLANE) * SUBLANE)

    # Per-call work: only adjacency build + node padding (weights already packed).
    a_hat = build_normalized_adjacency(edge_index, num_nodes)
    adj_p = _pad_to(a_hat, (pad_n, pad_n))                       # f32
    x_p = _pad_to(x, (pad_n, PAD_F)).astype(jnp.bfloat16)

    # --- advisory cost estimate (updated to the small padded shapes) ---------
    flops = (N_CONVS * (2 * pad_n * PAD_F * PAD_F + 2 * pad_n * pad_n * PAD_F)
             + 2 * (2 * PAD_F * PAD_F)          # lin1, lin2
             + 2 * pad_n * PAD_F)               # masked mean pool
    transcendentals = N_CONVS * pad_n * PAD_F + 2 * PAD_F
    bytes_accessed = (pad_n * pad_n * 4          # f32 adjacency
                      + pad_n * PAD_F * 2        # bf16 x
                      + N_WEIGHTS * PAD_F * PAD_F * 2   # bf16 weight stack
                      + N_WEIGHTS * PAD_F * 4           # f32 bias stack
                      + PAD_F * 4)                       # f32 output row

    vmem = pl.BlockSpec(memory_space=pltpu.MemorySpace.VMEM)
    out = pl.pallas_call(
        functools.partial(gcn_kernel, num_nodes),
        out_shape=jax.ShapeDtypeStruct((1, PAD_F), jnp.float32),
        in_specs=[vmem] * 4,
        out_specs=vmem,
        cost_estimate=pl.CostEstimate(
            flops=flops,
            transcendentals=transcendentals,
            bytes_accessed=bytes_accessed),
    )(adj_p, x_p, w_stack, b_stack)

    return out[:, :1]  # logical (1, 1) output, matching the PyTorch module


if __name__ == "__main__":
    NUM_NODES = 8
    IN_FEATS = 5
    HIDDEN = 32

    key = jax.random.PRNGKey(0)
    k_x, k_p = jax.random.split(key)

    # Node features (N, 5)
    x = jax.random.normal(k_x, (NUM_NODES, IN_FEATS), jnp.float32)

    # Undirected ring graph as edge_index (2, 2N)
    idx = jnp.arange(NUM_NODES, dtype=jnp.int32)
    nxt = (idx + 1) % NUM_NODES
    edge_index = jnp.stack([jnp.concatenate([idx, nxt]),
                            jnp.concatenate([nxt, idx])], axis=0)

    params = init_params(k_p, IN_FEATS, HIDDEN)
    packed = prepare_params(params)       # one-time pad + bf16 cast of all weights

    out = gcn_forward(x, edge_index, packed["w_stack"], packed["b_stack"])
    jax.block_until_ready(out)
    assert out.shape == (1, 1)
    print("KERNEL_OK")
</pallas_src>

<mosaic_0001>
module attributes {stable_mosaic.version = 11 : i64} {
  func.func @gcn_kernel(%arg0: memref<16x16xf32, #tpu.memory_space<vmem>>, %arg1: memref<16x128xbf16, #tpu.memory_space<vmem>>, %arg2: memref<11x128x128xbf16, #tpu.memory_space<vmem>>, %arg3: memref<11x128xf32, #tpu.memory_space<vmem>>, %arg4: memref<1x128xf32, #tpu.memory_space<vmem>>) attributes {dimension_semantics = [], scalar_prefetch = 0 : i64, scratch_operands = 0 : i64, tpu.core_type = #tpu.core_type<tc>} {
    %c0 = arith.constant 0 : index
    %c0_0 = arith.constant 0 : index
    %0 = vector.load %arg1[%c0, %c0_0] : memref<16x128xbf16, #tpu.memory_space<vmem>>, vector<16x128xbf16>
    %c0_1 = arith.constant 0 : index
    %c0_2 = arith.constant 0 : index
    %c0_3 = arith.constant 0 : index
    %1 = vector.load %arg2[%c0_1, %c0_2, %c0_3] : memref<11x128x128xbf16, #tpu.memory_space<vmem>>, vector<1x128x128xbf16>
    %2 = vector.shape_cast %1 : vector<1x128x128xbf16> to vector<128x128xbf16>
    %c0_4 = arith.constant 0 : index
    %c0_5 = arith.constant 0 : index
    %3 = vector.load %arg3[%c0_4, %c0_5] : memref<11x128xf32, #tpu.memory_space<vmem>>, vector<1x128xf32>
    %cst = arith.constant dense<0.000000e+00> : vector<16x128xf32>
    %4 = tpu.matmul %0, %2, %cst {dimension_numbers = #tpu.dot_dimension_numbers<[1], [0], [0], [1], [0, 0, 1, 1], [], []>} : vector<16x128xbf16>, vector<128x128xbf16>, vector<16x128xf32> -> vector<16x128xf32>
    %c0_6 = arith.constant 0 : index
    %c0_7 = arith.constant 0 : index
    %5 = vector.load %arg0[%c0_6, %c0_7] : memref<16x16xf32, #tpu.memory_space<vmem>>, vector<16x16xf32>
    %cst_8 = arith.constant dense<0.000000e+00> : vector<16x128xf32>
    %6 = tpu.matmul %5, %4, %cst_8 {dimension_numbers = #tpu.dot_dimension_numbers<[1], [0], [0], [1], [0, 0, 1, 1], [], []>} : vector<16x16xf32>, vector<16x128xf32>, vector<16x128xf32> -> vector<16x128xf32>
    %7 = vector.broadcast %3 : vector<1x128xf32> to vector<16x128xf32>
    %8 = arith.addf %6, %7 : vector<16x128xf32>
    %9 = math.tanh %8 : vector<16x128xf32>
    %10 = arith.truncf %9 : vector<16x128xf32> to vector<16x128xbf16>
    %c1 = arith.constant 1 : index
    %c0_9 = arith.constant 0 : index
    %c0_10 = arith.constant 0 : index
    %11 = vector.load %arg2[%c1, %c0_9, %c0_10] : memref<11x128x128xbf16, #tpu.memory_space<vmem>>, vector<1x128x128xbf16>
    %12 = vector.shape_cast %11 : vector<1x128x128xbf16> to vector<128x128xbf16>
    %c1_11 = arith.constant 1 : index
    %c0_12 = arith.constant 0 : index
    %13 = vector.load %arg3[%c1_11, %c0_12] : memref<11x128xf32, #tpu.memory_space<vmem>>, vector<1x128xf32>
    %cst_13 = arith.constant dense<0.000000e+00> : vector<16x128xf32>
    %14 = tpu.matmul %10, %12, %cst_13 {dimension_numbers = #tpu.dot_dimension_numbers<[1], [0], [0], [1], [0, 0, 1, 1], [], []>} : vector<16x128xbf16>, vector<128x128xbf16>, vector<16x128xf32> -> vector<16x128xf32>
    %c0_14 = arith.constant 0 : index
    %c0_15 = arith.constant 0 : index
    %15 = vector.load %arg0[%c0_14, %c0_15] : memref<16x16xf32, #tpu.memory_space<vmem>>, vector<16x16xf32>
    %cst_16 = arith.constant dense<0.000000e+00> : vector<16x128xf32>
    %16 = tpu.matmul %15, %14, %cst_16 {dimension_numbers = #tpu.dot_dimension_numbers<[1], [0], [0], [1], [0, 0, 1, 1], [], []>} : vector<16x16xf32>, vector<16x128xf32>, vector<16x128xf32> -> vector<16x128xf32>
    %17 = vector.broadcast %13 : vector<1x128xf32> to vector<16x128xf32>
    %18 = arith.addf %16, %17 : vector<16x128xf32>
    %19 = math.tanh %18 : vector<16x128xf32>
    %20 = arith.truncf %19 : vector<16x128xf32> to vector<16x128xbf16>
    %c2 = arith.constant 2 : index
    %c0_17 = arith.constant 0 : index
    %c0_18 = arith.constant 0 : index
    %21 = vector.load %arg2[%c2, %c0_17, %c0_18] : memref<11x128x128xbf16, #tpu.memory_space<vmem>>, vector<1x128x128xbf16>
    %22 = vector.shape_cast %21 : vector<1x128x128xbf16> to vector<128x128xbf16>
    %c2_19 = arith.constant 2 : index
    %c0_20 = arith.constant 0 : index
    %23 = vector.load %arg3[%c2_19, %c0_20] : memref<11x128xf32, #tpu.memory_space<vmem>>, vector<1x128xf32>
    %cst_21 = arith.constant dense<0.000000e+00> : vector<16x128xf32>
    %24 = tpu.matmul %20, %22, %cst_21 {dimension_numbers = #tpu.dot_dimension_numbers<[1], [0], [0], [1], [0, 0, 1, 1], [], []>} : vector<16x128xbf16>, vector<128x128xbf16>, vector<16x128xf32> -> vector<16x128xf32>
    %c0_22 = arith.constant 0 : index
    %c0_23 = arith.constant 0 : index
    %25 = vector.load %arg0[%c0_22, %c0_23] : memref<16x16xf32, #tpu.memory_space<vmem>>, vector<16x16xf32>
    %cst_24 = arith.constant dense<0.000000e+00> : vector<16x128xf32>
    %26 = tpu.matmul %25, %24, %cst_24 {dimension_numbers = #tpu.dot_dimension_numbers<[1], [0], [0], [1], [0, 0, 1, 1], [], []>} : vector<16x16xf32>, vector<16x128xf32>, vector<16x128xf32> -> vector<16x128xf32>
    %27 = vector.broadcast %23 : vector<1x128xf32> to vector<16x128xf32>
    %28 = arith.addf %26, %27 : vector<16x128xf32>
    %29 = math.tanh %28 : vector<16x128xf32>
    %30 = arith.truncf %29 : vector<16x128xf32> to vector<16x128xbf16>
    %c3 = arith.constant 3 : index
    %c0_25 = arith.constant 0 : index
    %c0_26 = arith.constant 0 : index
    %31 = vector.load %arg2[%c3, %c0_25, %c0_26] : memref<11x128x128xbf16, #tpu.memory_space<vmem>>, vector<1x128x128xbf16>
    %32 = vector.shape_cast %31 : vector<1x128x128xbf16> to vector<128x128xbf16>
    %c3_27 = arith.constant 3 : index
    %c0_28 = arith.constant 0 : index
    %33 = vector.load %arg3[%c3_27, %c0_28] : memref<11x128xf32, #tpu.memory_space<vmem>>, vector<1x128xf32>
    %cst_29 = arith.constant dense<0.000000e+00> : vector<16x128xf32>
    %34 = tpu.matmul %30, %32, %cst_29 {dimension_numbers = #tpu.dot_dimension_numbers<[1], [0], [0], [1], [0, 0, 1, 1], [], []>} : vector<16x128xbf16>, vector<128x128xbf16>, vector<16x128xf32> -> vector<16x128xf32>
    %c0_30 = arith.constant 0 : index
    %c0_31 = arith.constant 0 : index
    %35 = vector.load %arg0[%c0_30, %c0_31] : memref<16x16xf32, #tpu.memory_space<vmem>>, vector<16x16xf32>
    %cst_32 = arith.constant dense<0.000000e+00> : vector<16x128xf32>
    %36 = tpu.matmul %35, %34, %cst_32 {dimension_numbers = #tpu.dot_dimension_numbers<[1], [0], [0], [1], [0, 0, 1, 1], [], []>} : vector<16x16xf32>, vector<16x128xf32>, vector<16x128xf32> -> vector<16x128xf32>
    %37 = vector.broadcast %33 : vector<1x128xf32> to vector<16x128xf32>
    %38 = arith.addf %36, %37 : vector<16x128xf32>
    %39 = math.tanh %38 : vector<16x128xf32>
    %40 = arith.truncf %39 : vector<16x128xf32> to vector<16x128xbf16>
    %c4 = arith.constant 4 : index
    %c0_33 = arith.constant 0 : index
    %c0_34 = arith.constant 0 : index
    %41 = vector.load %arg2[%c4, %c0_33, %c0_34] : memref<11x128x128xbf16, #tpu.memory_space<vmem>>, vector<1x128x128xbf16>
    %42 = vector.shape_cast %41 : vector<1x128x128xbf16> to vector<128x128xbf16>
    %c4_35 = arith.constant 4 : index
    %c0_36 = arith.constant 0 : index
    %43 = vector.load %arg3[%c4_35, %c0_36] : memref<11x128xf32, #tpu.memory_space<vmem>>, vector<1x128xf32>
    %cst_37 = arith.constant dense<0.000000e+00> : vector<16x128xf32>
    %44 = tpu.matmul %40, %42, %cst_37 {dimension_numbers = #tpu.dot_dimension_numbers<[1], [0], [0], [1], [0, 0, 1, 1], [], []>} : vector<16x128xbf16>, vector<128x128xbf16>, vector<16x128xf32> -> vector<16x128xf32>
    %c0_38 = arith.constant 0 : index
    %c0_39 = arith.constant 0 : index
    %45 = vector.load %arg0[%c0_38, %c0_39] : memref<16x16xf32, #tpu.memory_space<vmem>>, vector<16x16xf32>
    %cst_40 = arith.constant dense<0.000000e+00> : vector<16x128xf32>
    %46 = tpu.matmul %45, %44, %cst_40 {dimension_numbers = #tpu.dot_dimension_numbers<[1], [0], [0], [1], [0, 0, 1, 1], [], []>} : vector<16x16xf32>, vector<16x128xf32>, vector<16x128xf32> -> vector<16x128xf32>
    %47 = vector.broadcast %43 : vector<1x128xf32> to vector<16x128xf32>
    %48 = arith.addf %46, %47 : vector<16x128xf32>
    %49 = math.tanh %48 : vector<16x128xf32>
    %50 = arith.truncf %49 : vector<16x128xf32> to vector<16x128xbf16>
    %c5 = arith.constant 5 : index
    %c0_41 = arith.constant 0 : index
    %c0_42 = arith.constant 0 : index
    %51 = vector.load %arg2[%c5, %c0_41, %c0_42] : memref<11x128x128xbf16, #tpu.memory_space<vmem>>, vector<1x128x128xbf16>
    %52 = vector.shape_cast %51 : vector<1x128x128xbf16> to vector<128x128xbf16>
    %c5_43 = arith.constant 5 : index
    %c0_44 = arith.constant 0 : index
    %53 = vector.load %arg3[%c5_43, %c0_44] : memref<11x128xf32, #tpu.memory_space<vmem>>, vector<1x128xf32>
    %cst_45 = arith.constant dense<0.000000e+00> : vector<16x128xf32>
    %54 = tpu.matmul %50, %52, %cst_45 {dimension_numbers = #tpu.dot_dimension_numbers<[1], [0], [0], [1], [0, 0, 1, 1], [], []>} : vector<16x128xbf16>, vector<128x128xbf16>, vector<16x128xf32> -> vector<16x128xf32>
    %c0_46 = arith.constant 0 : index
    %c0_47 = arith.constant 0 : index
    %55 = vector.load %arg0[%c0_46, %c0_47] : memref<16x16xf32, #tpu.memory_space<vmem>>, vector<16x16xf32>
    %cst_48 = arith.constant dense<0.000000e+00> : vector<16x128xf32>
    %56 = tpu.matmul %55, %54, %cst_48 {dimension_numbers = #tpu.dot_dimension_numbers<[1], [0], [0], [1], [0, 0, 1, 1], [], []>} : vector<16x16xf32>, vector<16x128xf32>, vector<16x128xf32> -> vector<16x128xf32>
    %57 = vector.broadcast %53 : vector<1x128xf32> to vector<16x128xf32>
    %58 = arith.addf %56, %57 : vector<16x128xf32>
    %59 = math.tanh %58 : vector<16x128xf32>
    %60 = arith.truncf %59 : vector<16x128xf32> to vector<16x128xbf16>
    %c6 = arith.constant 6 : index
    %c0_49 = arith.constant 0 : index
    %c0_50 = arith.constant 0 : index
    %61 = vector.load %arg2[%c6, %c0_49, %c0_50] : memref<11x128x128xbf16, #tpu.memory_space<vmem>>, vector<1x128x128xbf16>
    %62 = vector.shape_cast %61 : vector<1x128x128xbf16> to vector<128x128xbf16>
    %c6_51 = arith.constant 6 : index
    %c0_52 = arith.constant 0 : index
    %63 = vector.load %arg3[%c6_51, %c0_52] : memref<11x128xf32, #tpu.memory_space<vmem>>, vector<1x128xf32>
    %cst_53 = arith.constant dense<0.000000e+00> : vector<16x128xf32>
    %64 = tpu.matmul %60, %62, %cst_53 {dimension_numbers = #tpu.dot_dimension_numbers<[1], [0], [0], [1], [0, 0, 1, 1], [], []>} : vector<16x128xbf16>, vector<128x128xbf16>, vector<16x128xf32> -> vector<16x128xf32>
    %c0_54 = arith.constant 0 : index
    %c0_55 = arith.constant 0 : index
    %65 = vector.load %arg0[%c0_54, %c0_55] : memref<16x16xf32, #tpu.memory_space<vmem>>, vector<16x16xf32>
    %cst_56 = arith.constant dense<0.000000e+00> : vector<16x128xf32>
    %66 = tpu.matmul %65, %64, %cst_56 {dimension_numbers = #tpu.dot_dimension_numbers<[1], [0], [0], [1], [0, 0, 1, 1], [], []>} : vector<16x16xf32>, vector<16x128xf32>, vector<16x128xf32> -> vector<16x128xf32>
    %67 = vector.broadcast %63 : vector<1x128xf32> to vector<16x128xf32>
    %68 = arith.addf %66, %67 : vector<16x128xf32>
    %69 = math.tanh %68 : vector<16x128xf32>
    %70 = arith.truncf %69 : vector<16x128xf32> to vector<16x128xbf16>
    %c7 = arith.constant 7 : index
    %c0_57 = arith.constant 0 : index
    %c0_58 = arith.constant 0 : index
    %71 = vector.load %arg2[%c7, %c0_57, %c0_58] : memref<11x128x128xbf16, #tpu.memory_space<vmem>>, vector<1x128x128xbf16>
    %72 = vector.shape_cast %71 : vector<1x128x128xbf16> to vector<128x128xbf16>
    %c7_59 = arith.constant 7 : index
    %c0_60 = arith.constant 0 : index
    %73 = vector.load %arg3[%c7_59, %c0_60] : memref<11x128xf32, #tpu.memory_space<vmem>>, vector<1x128xf32>
    %cst_61 = arith.constant dense<0.000000e+00> : vector<16x128xf32>
    %74 = tpu.matmul %70, %72, %cst_61 {dimension_numbers = #tpu.dot_dimension_numbers<[1], [0], [0], [1], [0, 0, 1, 1], [], []>} : vector<16x128xbf16>, vector<128x128xbf16>, vector<16x128xf32> -> vector<16x128xf32>
    %c0_62 = arith.constant 0 : index
    %c0_63 = arith.constant 0 : index
    %75 = vector.load %arg0[%c0_62, %c0_63] : memref<16x16xf32, #tpu.memory_space<vmem>>, vector<16x16xf32>
    %cst_64 = arith.constant dense<0.000000e+00> : vector<16x128xf32>
    %76 = tpu.matmul %75, %74, %cst_64 {dimension_numbers = #tpu.dot_dimension_numbers<[1], [0], [0], [1], [0, 0, 1, 1], [], []>} : vector<16x16xf32>, vector<16x128xf32>, vector<16x128xf32> -> vector<16x128xf32>
    %77 = vector.broadcast %73 : vector<1x128xf32> to vector<16x128xf32>
    %78 = arith.addf %76, %77 : vector<16x128xf32>
    %79 = math.tanh %78 : vector<16x128xf32>
    %80 = arith.truncf %79 : vector<16x128xf32> to vector<16x128xbf16>
    %c8 = arith.constant 8 : index
    %c0_65 = arith.constant 0 : index
    %c0_66 = arith.constant 0 : index
    %81 = vector.load %arg2[%c8, %c0_65, %c0_66] : memref<11x128x128xbf16, #tpu.memory_space<vmem>>, vector<1x128x128xbf16>
    %82 = vector.shape_cast %81 : vector<1x128x128xbf16> to vector<128x128xbf16>
    %c8_67 = arith.constant 8 : index
    %c0_68 = arith.constant 0 : index
    %83 = vector.load %arg3[%c8_67, %c0_68] : memref<11x128xf32, #tpu.memory_space<vmem>>, vector<1x128xf32>
    %cst_69 = arith.constant dense<0.000000e+00> : vector<16x128xf32>
    %84 = tpu.matmul %80, %82, %cst_69 {dimension_numbers = #tpu.dot_dimension_numbers<[1], [0], [0], [1], [0, 0, 1, 1], [], []>} : vector<16x128xbf16>, vector<128x128xbf16>, vector<16x128xf32> -> vector<16x128xf32>
    %c0_70 = arith.constant 0 : index
    %c0_71 = arith.constant 0 : index
    %85 = vector.load %arg0[%c0_70, %c0_71] : memref<16x16xf32, #tpu.memory_space<vmem>>, vector<16x16xf32>
    %cst_72 = arith.constant dense<0.000000e+00> : vector<16x128xf32>
    %86 = tpu.matmul %85, %84, %cst_72 {dimension_numbers = #tpu.dot_dimension_numbers<[1], [0], [0], [1], [0, 0, 1, 1], [], []>} : vector<16x16xf32>, vector<16x128xf32>, vector<16x128xf32> -> vector<16x128xf32>
    %87 = vector.broadcast %83 : vector<1x128xf32> to vector<16x128xf32>
    %88 = arith.addf %86, %87 : vector<16x128xf32>
    %89 = math.tanh %88 : vector<16x128xf32>
    %90 = tpu.iota {dimensions = array<i32: 0>} : vector<16x1xi32>
    %c8_i32 = arith.constant 8 : i32
    %91 = vector.broadcast %c8_i32 : i32 to vector<16x1xi32>
    %92 = arith.cmpi slt, %90, %91 : vector<16x1xi32>
    %cst_73 = arith.constant 1.250000e-01 : f32
    %cst_74 = arith.constant 0.000000e+00 : f32
    %93 = vector.broadcast %cst_73 : f32 to vector<16x1xf32>
    %94 = vector.broadcast %cst_74 : f32 to vector<16x1xf32>
    %95 = arith.select %92, %93, %94 : vector<16x1xi1>, vector<16x1xf32>
    %96 = vector.broadcast %95 : vector<16x1xf32> to vector<16x128xf32>
    %97 = arith.mulf %89, %96 : vector<16x128xf32>
    %cst_75 = arith.constant dense<0.000000e+00> : vector<128xf32>
    %98 = vector.multi_reduction <add>, %97, %cst_75 [0] : vector<16x128xf32> to vector<128xf32>
    %99 = vector.shape_cast %98 : vector<128xf32> to vector<1x128xf32>
    %100 = arith.truncf %99 : vector<1x128xf32> to vector<1x128xbf16>
    %c9 = arith.constant 9 : index
    %c0_76 = arith.constant 0 : index
    %c0_77 = arith.constant 0 : index
    %101 = vector.load %arg2[%c9, %c0_76, %c0_77] : memref<11x128x128xbf16, #tpu.memory_space<vmem>>, vector<1x128x128xbf16>
    %102 = vector.shape_cast %101 : vector<1x128x128xbf16> to vector<128x128xbf16>
    %cst_78 = arith.constant dense<0.000000e+00> : vector<1x128xf32>
    %103 = tpu.matmul %100, %102, %cst_78 {dimension_numbers = #tpu.dot_dimension_numbers<[1], [0], [0], [1], [0, 0, 1, 1], [], []>} : vector<1x128xbf16>, vector<128x128xbf16>, vector<1x128xf32> -> vector<1x128xf32>
    %c9_79 = arith.constant 9 : index
    %c0_80 = arith.constant 0 : index
    %104 = vector.load %arg3[%c9_79, %c0_80] : memref<11x128xf32, #tpu.memory_space<vmem>>, vector<1x128xf32>
    %105 = arith.addf %103, %104 : vector<1x128xf32>
    %106 = math.tanh %105 : vector<1x128xf32>
    %107 = arith.truncf %106 : vector<1x128xf32> to vector<1x128xbf16>
    %c10 = arith.constant 10 : index
    %c0_81 = arith.constant 0 : index
    %c0_82 = arith.constant 0 : index
    %108 = vector.load %arg2[%c10, %c0_81, %c0_82] : memref<11x128x128xbf16, #tpu.memory_space<vmem>>, vector<1x128x128xbf16>
    %109 = vector.shape_cast %108 : vector<1x128x128xbf16> to vector<128x128xbf16>
    %cst_83 = arith.constant dense<0.000000e+00> : vector<1x128xf32>
    %110 = tpu.matmul %107, %109, %cst_83 {dimension_numbers = #tpu.dot_dimension_numbers<[1], [0], [0], [1], [0, 0, 1, 1], [], []>} : vector<1x128xbf16>, vector<128x128xbf16>, vector<1x128xf32> -> vector<1x128xf32>
    %c10_84 = arith.constant 10 : index
    %c0_85 = arith.constant 0 : index
    %111 = vector.load %arg3[%c10_84, %c0_85] : memref<11x128xf32, #tpu.memory_space<vmem>>, vector<1x128xf32>
    %112 = arith.addf %110, %111 : vector<1x128xf32>
    %113 = math.tanh %112 : vector<1x128xf32>
    %c0_86 = arith.constant 0 : index
    %c0_87 = arith.constant 0 : index
    %114 = vector.load %arg4[%c0_86, %c0_87] : memref<1x128xf32, #tpu.memory_space<vmem>>, vector<1x128xf32>
    tpu.vector_store %arg4[%c0_86, %c0_87], %113 {strides = array<i32>} : memref<1x128xf32, #tpu.memory_space<vmem>>, vector<1x128xf32>,
    return
  }
}

</mosaic_0001>

<llo_original>
// kernel: gcn_forward.1
$region0: #{gcn_forward.1}
  #allocation0 [shape = 'u32[]', space=smem, size = 0x4, offset = 0x4, fixed_abs, tag = 'smem constant byte address 0x4 - core index']
  #allocation1 [shape = 'u32[72,128]{1,0:T(1,128)}', space=vmem, size = 0x9000, scoped, tag = 'internal scratch']
  %s0 = inlined_call_operand.vmem [shape: f32[16,16], index: 0, kind: input, shape index: {}]
  %s1 = inlined_call_operand.vmem [shape: bf16[16,128], index: 1, kind: input, shape index: {}]
  %s2 = inlined_call_operand.vmem [shape: bf16[11,128,128], index: 2, kind: input, shape index: {}]
  %s3 = inlined_call_operand.vmem [shape: f32[11,128], index: 3, kind: input, shape index: {}]
  %s4 = inlined_call_operand.hbm [shape: f32[1,128], index: 4, kind: output, shape index: {}]
  %s5 = sld [smem:[#allocation0]]
  $region26: #{gcn_forward.1} parent=0
    _
  %s7 = ssub.s32 1, %s5
  %s8 = scalar_select 0, %s7, %s5
  $region1: #{gcn_forward.1} parent=0
    #allocation2 [shape = 'u8[512]{0}', space=vmem, size = 0x400, scoped, tag = 'output window, operand 0, single buffered']
    #allocation3 [shape = 's32[1]{0}', space=sflag, size = 0x4, scoped, tag = 'scoped memory for gcn_forward.1']
    %9 = vsyncpa [#allocation3], 0
    // Predicated region
    $region2: #{gcn_forward.1} parent=1 // pred_check
      _
    $region3: #{gcn_forward.1} parent=1 // pred_check_branch
      %11 = sbr.rel (0) target = $region5
    $region4: #{gcn_forward.1} parent=1 // pred_region
      _
    $region5: #{gcn_forward.1} parent=1 // pred_fallthru
      _
    // Predicated region
    $region6: #{gcn_forward.1} parent=1 // pred_check
      _
    $region7: #{gcn_forward.1} parent=1 // pred_check_branch
      %13 = sbr.rel (0) target = $region9
    $region8: #{gcn_forward.1} parent=1 // pred_region
      _
    $region9: #{gcn_forward.1} parent=1 // pred_fallthru
      _
    // Predicated region
    $region10: #{gcn_forward.1} parent=1 // pred_check
      _
    $region11: #{gcn_forward.1} parent=1 // pred_check_branch
      %15 = sbr.rel (0) target = $region13
    $region12: #{gcn_forward.1} parent=1 // pred_region
      _
    $region13: #{gcn_forward.1} parent=1 // pred_fallthru
      _
    // Predicated region
    $region14: #{gcn_forward.1} parent=1 // pred_check
      _
    $region15: #{gcn_forward.1} parent=1 // pred_check_branch
      %17 = sbr.rel (0) target = $region17
    $region16: #{gcn_forward.1} parent=1 // pred_region
      _
    $region17: #{gcn_forward.1} parent=1 // pred_fallthru
      _
    %v18 = vld [vmem:[%s1] sm:$0xf]
    %v19 = vld [vmem:[%s1 + $0x4] sm:$0xf]
    %v20 = vld [vmem:[%s2] sm:$0xf]
    %v21 = vld [vmem:[%s2 + $0x4] sm:$0xf]
    %v22 = vld [vmem:[%s2 + $0x8] sm:$0xf]
    %v23 = vld [vmem:[%s2 + $0xc] sm:$0xf]
    %v24 = vld [vmem:[%s2 + $0x10] sm:$0xf]
    %v25 = vld [vmem:[%s2 + $0x14] sm:$0xf]
    %v26 = vld [vmem:[%s2 + $0x18] sm:$0xf]
    %v27 = vld [vmem:[%s2 + $0x1c] sm:$0xf]
    %v28 = vld [vmem:[%s2 + $0x20] sm:$0xf]
    %v29 = vld [vmem:[%s2 + $0x24] sm:$0xf]
    %v30 = vld [vmem:[%s2 + $0x28] sm:$0xf]
    %v31 = vld [vmem:[%s2 + $0x2c] sm:$0xf]
    %v32 = vld [vmem:[%s2 + $0x30] sm:$0xf]
    %v33 = vld [vmem:[%s2 + $0x34] sm:$0xf]
    %v34 = vld [vmem:[%s2 + $0x38] sm:$0xf]
    %v35 = vld [vmem:[%s2 + $0x3c] sm:$0xf]
    %v36 = vld [vmem:[%s3] sm:$0x1]
    %v39 = vunpack.c.l.b16 %v18
    %v40 = vunpack.c.l.b16 %v19
    %v41 = vpack.c.b16 %v40, %v39
    %v59 = vunpack.c.l.b16 %v20
    %v60 = vunpack.c.l.b16 %v21
    %v61 = vunpack.c.l.b16 %v22
    %v62 = vunpack.c.l.b16 %v23
    %v63 = vunpack.c.l.b16 %v24
    %v64 = vunpack.c.l.b16 %v25
    %v65 = vunpack.c.l.b16 %v26
    %v66 = vunpack.c.l.b16 %v27
    %v67 = vunpack.c.l.b16 %v28
    %v68 = vunpack.c.l.b16 %v29
    %v69 = vunpack.c.l.b16 %v30
    %v70 = vunpack.c.l.b16 %v31
    %v71 = vunpack.c.l.b16 %v32
    %v72 = vunpack.c.l.b16 %v33
    %v73 = vunpack.c.l.b16 %v34
    %v74 = vunpack.c.l.b16 %v35
    %v75 = vpack.c.b16 %v60, %v59
    %v76 = vpack.c.b16 %v62, %v61
    %v77 = vpack.c.b16 %v64, %v63
    %v78 = vpack.c.b16 %v66, %v65
    %v79 = vpack.c.b16 %v68, %v67
    %v80 = vpack.c.b16 %v70, %v69
    %v81 = vpack.c.b16 %v72, %v71
    %v82 = vpack.c.b16 %v74, %v73
    %91 = vmatpush.bf16.msra.mxu0 %v82
    %92 = vmatpush.bf16.msra.mxu0 %v81
    %93 = vmatpush.bf16.msra.mxu0 %v80
    %94 = vmatpush.bf16.msra.mxu0 %v79
    %95 = vmatpush.bf16.msra.mxu0 %v78
    %96 = vmatpush.bf16.msra.mxu0 %v77
    %97 = vmatpush.bf16.msra.mxu0 %v76
    %98 = vmatpush.bf16.msra.mxu0 %v75
    %99 = vmatmul.bf16.gmra.mxu0 %v41
    %v100 = vpop.f32.mrf.mxu0
    %v101 = vadd.f32 0.0, %v100
    %v102 = vpop.f32.mrf.mxu0
    %v103 = vadd.f32 0.0, %v102
    %104 = vdwg.mxu0
    %v105 = vld [vmem:[%s0] sm:$0xff]
    %v106 = vld [vmem:[%s0 + $0x8] sm:$0xff]
    %v107 = vperm.slane %v36, 0
    %vm108 = vcmask 130048
    %v110 = vsel %vm108, %v105, 0
    %v113 = vsel %vm108, %v106, 0
    %115 = vmatpush.msra.mxu0 0.0
    %116 = vmatpush.msra.mxu0 0.0
    %117 = vmatpush.msra.mxu0 0.0
    %118 = vmatpush.msra.mxu0 0.0
    %119 = vmatpush.msra.mxu0 0.0
    %120 = vmatpush.msra.mxu0 0.0
    %121 = vmatpush.msra.mxu0 0.0
    %122 = vmatpush.msra.mxu0 0.0
    %123 = vmatpush.msra.mxu0 0.0
    %124 = vmatpush.msra.mxu0 0.0
    %125 = vmatpush.msra.mxu0 0.0
    %126 = vmatpush.msra.mxu0 0.0
    %127 = vmatpush.msra.mxu0 0.0
    %128 = vmatpush.msra.mxu0 0.0
    %129 = vmatpush.msra.mxu0 %v103
    %130 = vmatpush.msra.mxu0 %v101
    %131 = vmatmul.f32.gmra.mxu0 %v110
    %v132 = vpop.f32.mrf.mxu0
    %v133 = vadd.f32 %v107, %v132
    %134 = vmatmul.f32.gmra.mxu0 %v113
    %v135 = vpop.f32.mrf.mxu0
    %v136 = vadd.f32 %v107, %v135
    %137 = vdwg.mxu0
    %v138 = vtanh.pop %v133
    %v139 = vtanh.pop %v136
    %v140 = vpack.c.bf16 %v139, %v138
    %s141 = scalar_lea.vmem %s2, 64
    %v142 = vld [vmem:[%s141] sm:$0xf]
    %v143 = vld [vmem:[%s141 + $0x4] sm:$0xf]
    %v144 = vld [vmem:[%s141 + $0x8] sm:$0xf]
    %v145 = vld [vmem:[%s141 + $0xc] sm:$0xf]
    %v146 = vld [vmem:[%s141 + $0x10] sm:$0xf]
    %v147 = vld [vmem:[%s141 + $0x14] sm:$0xf]
    %v148 = vld [vmem:[%s141 + $0x18] sm:$0xf]
    %v149 = vld [vmem:[%s141 + $0x1c] sm:$0xf]
    %v150 = vld [vmem:[%s141 + $0x20] sm:$0xf]
    %v151 = vld [vmem:[%s141 + $0x24] sm:$0xf]
    %v152 = vld [vmem:[%s141 + $0x28] sm:$0xf]
    %v153 = vld [vmem:[%s141 + $0x2c] sm:$0xf]
    %v154 = vld [vmem:[%s141 + $0x30] sm:$0xf]
    %v155 = vld [vmem:[%s141 + $0x34] sm:$0xf]
    %v156 = vld [vmem:[%s141 + $0x38] sm:$0xf]
    %v157 = vld [vmem:[%s141 + $0x3c] sm:$0xf]
    %v158 = vld [vmem:[%s3 + $0x1] sm:$0x1]
    %v175 = vunpack.c.l.b16 %v142
    %v176 = vunpack.c.l.b16 %v143
    %v177 = vunpack.c.l.b16 %v144
    %v178 = vunpack.c.l.b16 %v145
    %v179 = vunpack.c.l.b16 %v146
    %v180 = vunpack.c.l.b16 %v147
    %v181 = vunpack.c.l.b16 %v148
    %v182 = vunpack.c.l.b16 %v149
    %v183 = vunpack.c.l.b16 %v150
    %v184 = vunpack.c.l.b16 %v151
    %v185 = vunpack.c.l.b16 %v152
    %v186 = vunpack.c.l.b16 %v153
    %v187 = vunpack.c.l.b16 %v154
    %v188 = vunpack.c.l.b16 %v155
    %v189 = vunpack.c.l.b16 %v156
    %v190 = vunpack.c.l.b16 %v157
    %v191 = vpack.c.b16 %v176, %v175
    %v192 = vpack.c.b16 %v178, %v177
    %v193 = vpack.c.b16 %v180, %v179
    %v194 = vpack.c.b16 %v182, %v181
    %v195 = vpack.c.b16 %v184, %v183
    %v196 = vpack.c.b16 %v186, %v185
    %v197 = vpack.c.b16 %v188, %v187
    %v198 = vpack.c.b16 %v190, %v189
    %207 = vmatpush.bf16.msra.mxu0 %v198
    %208 = vmatpush.bf16.msra.mxu0 %v197
    %209 = vmatpush.bf16.msra.mxu0 %v196
    %210 = vmatpush.bf16.msra.mxu0 %v195
    %211 = vmatpush.bf16.msra.mxu0 %v194
    %212 = vmatpush.bf16.msra.mxu0 %v193
    %213 = vmatpush.bf16.msra.mxu0 %v192
    %214 = vmatpush.bf16.msra.mxu0 %v191
    %215 = vmatmul.bf16.gmra.mxu0 %v140
    %v216 = vpop.f32.mrf.mxu0
    %v217 = vadd.f32 0.0, %v216
    %v218 = vpop.f32.mrf.mxu0
    %v219 = vadd.f32 0.0, %v218
    %220 = vdwg.mxu0
    %v221 = vperm.slane %v158, 0
    %222 = vmatpush.msra.mxu0 0.0
    %223 = vmatpush.msra.mxu0 0.0
    %224 = vmatpush.msra.mxu0 0.0
    %225 = vmatpush.msra.mxu0 0.0
    %226 = vmatpush.msra.mxu0 0.0
    %227 = vmatpush.msra.mxu0 0.0
    %228 = vmatpush.msra.mxu0 0.0
    %229 = vmatpush.msra.mxu0 0.0
    %230 = vmatpush.msra.mxu0 0.0
    %231 = vmatpush.msra.mxu0 0.0
    %232 = vmatpush.msra.mxu0 0.0
    %233 = vmatpush.msra.mxu0 0.0
    %234 = vmatpush.msra.mxu0 0.0
    %235 = vmatpush.msra.mxu0 0.0
    %236 = vmatpush.msra.mxu0 %v219
    %237 = vmatpush.msra.mxu0 %v217
    %238 = vmatmul.f32.gmra.mxu0 %v110
    %v239 = vpop.f32.mrf.mxu0
    %v240 = vadd.f32 %v221, %v239
    %241 = vmatmul.f32.gmra.mxu0 %v113
    %v242 = vpop.f32.mrf.mxu0
    %v243 = vadd.f32 %v221, %v242
    %244 = vdwg.mxu0
    %v245 = vtanh.pop %v240
    %v246 = vtanh.pop %v243
    %v247 = vpack.c.bf16 %v246, %v245
    %s248 = scalar_lea.vmem %s2, 128
    %v249 = vld [vmem:[%s248] sm:$0xf]
    %v250 = vld [vmem:[%s248 + $0x4] sm:$0xf]
    %v251 = vld [vmem:[%s248 + $0x8] sm:$0xf]
    %v252 = vld [vmem:[%s248 + $0xc] sm:$0xf]
    %v253 = vld [vmem:[%s248 + $0x10] sm:$0xf]
    %v254 = vld [vmem:[%s248 + $0x14] sm:$0xf]
    %v255 = vld [vmem:[%s248 + $0x18] sm:$0xf]
    %v256 = vld [vmem:[%s248 + $0x1c] sm:$0xf]
    %v257 = vld [vmem:[%s248 + $0x20] sm:$0xf]
    %v258 = vld [vmem:[%s248 + $0x24] sm:$0xf]
    %v259 = vld [vmem:[%s248 + $0x28] sm:$0xf]
    %v260 = vld [vmem:[%s248 + $0x2c] sm:$0xf]
    %v261 = vld [vmem:[%s248 + $0x30] sm:$0xf]
    %v262 = vld [vmem:[%s248 + $0x34] sm:$0xf]
    %v263 = vld [vmem:[%s248 + $0x38] sm:$0xf]
    %v264 = vld [vmem:[%s248 + $0x3c] sm:$0xf]
    %v265 = vld [vmem:[%s3 + $0x2] sm:$0x1]
    %v282 = vunpack.c.l.b16 %v249
    %v283 = vunpack.c.l.b16 %v250
    %v284 = vunpack.c.l.b16 %v251
    %v285 = vunpack.c.l.b16 %v252
    %v286 = vunpack.c.l.b16 %v253
    %v287 = vunpack.c.l.b16 %v254
    %v288 = vunpack.c.l.b16 %v255
    %v289 = vunpack.c.l.b16 %v256
    %v290 = vunpack.c.l.b16 %v257
    %v291 = vunpack.c.l.b16 %v258
    %v292 = vunpack.c.l.b16 %v259
    %v293 = vunpack.c.l.b16 %v260
    %v294 = vunpack.c.l.b16 %v261
    %v295 = vunpack.c.l.b16 %v262
    %v296 = vunpack.c.l.b16 %v263
    %v297 = vunpack.c.l.b16 %v264
    %v298 = vpack.c.b16 %v283, %v282
    %v299 = vpack.c.b16 %v285, %v284
    %v300 = vpack.c.b16 %v287, %v286
    %v301 = vpack.c.b16 %v289, %v288
    %v302 = vpack.c.b16 %v291, %v290
    %v303 = vpack.c.b16 %v293, %v292
    %v304 = vpack.c.b16 %v295, %v294
    %v305 = vpack.c.b16 %v297, %v296
    %314 = vmatpush.bf16.msra.mxu0 %v305
    %315 = vmatpush.bf16.msra.mxu0 %v304
    %316 = vmatpush.bf16.msra.mxu0 %v303
    %317 = vmatpush.bf16.msra.mxu0 %v302
    %318 = vmatpush.bf16.msra.mxu0 %v301
    %319 = vmatpush.bf16.msra.mxu0 %v300
    %320 = vmatpush.bf16.msra.mxu0 %v299
    %321 = vmatpush.bf16.msra.mxu0 %v298
    %322 = vmatmul.bf16.gmra.mxu0 %v247
    %v323 = vpop.f32.mrf.mxu0
    %v324 = vadd.f32 0.0, %v323
    %v325 = vpop.f32.mrf.mxu0
    %v326 = vadd.f32 0.0, %v325
    %327 = vdwg.mxu0
    %v328 = vperm.slane %v265, 0
    %329 = vmatpush.msra.mxu0 0.0
    %330 = vmatpush.msra.mxu0 0.0
    %331 = vmatpush.msra.mxu0 0.0
    %332 = vmatpush.msra.mxu0 0.0
    %333 = vmatpush.msra.mxu0 0.0
    %334 = vmatpush.msra.mxu0 0.0
    %335 = vmatpush.msra.mxu0 0.0
    %336 = vmatpush.msra.mxu0 0.0
    %337 = vmatpush.msra.mxu0 0.0
    %338 = vmatpush.msra.mxu0 0.0
    %339 = vmatpush.msra.mxu0 0.0
    %340 = vmatpush.msra.mxu0 0.0
    %341 = vmatpush.msra.mxu0 0.0
    %342 = vmatpush.msra.mxu0 0.0
    %343 = vmatpush.msra.mxu0 %v326
    %344 = vmatpush.msra.mxu0 %v324
    %345 = vmatmul.f32.gmra.mxu0 %v110
    %v346 = vpop.f32.mrf.mxu0
    %v347 = vadd.f32 %v328, %v346
    %348 = vmatmul.f32.gmra.mxu0 %v113
    %v349 = vpop.f32.mrf.mxu0
    %v350 = vadd.f32 %v328, %v349
    %351 = vdwg.mxu0
    %v352 = vtanh.pop %v347
    %v353 = vtanh.pop %v350
    %v354 = vpack.c.bf16 %v353, %v352
    %s355 = scalar_lea.vmem %s2, 192
    %v356 = vld [vmem:[%s355] sm:$0xf]
    %v357 = vld [vmem:[%s355 + $0x4] sm:$0xf]
    %v358 = vld [vmem:[%s355 + $0x8] sm:$0xf]
    %v359 = vld [vmem:[%s355 + $0xc] sm:$0xf]
    %v360 = vld [vmem:[%s355 + $0x10] sm:$0xf]
    %v361 = vld [vmem:[%s355 + $0x14] sm:$0xf]
    %v362 = vld [vmem:[%s355 + $0x18] sm:$0xf]
    %v363 = vld [vmem:[%s355 + $0x1c] sm:$0xf]
    %v364 = vld [vmem:[%s355 + $0x20] sm:$0xf]
    %v365 = vld [vmem:[%s355 + $0x24] sm:$0xf]
    %v366 = vld [vmem:[%s355 + $0x28] sm:$0xf]
    %v367 = vld [vmem:[%s355 + $0x2c] sm:$0xf]
    %v368 = vld [vmem:[%s355 + $0x30] sm:$0xf]
    %v369 = vld [vmem:[%s355 + $0x34] sm:$0xf]
    %v370 = vld [vmem:[%s355 + $0x38] sm:$0xf]
    %v371 = vld [vmem:[%s355 + $0x3c] sm:$0xf]
    %v372 = vld [vmem:[%s3 + $0x3] sm:$0x1]
    %v389 = vunpack.c.l.b16 %v356
    %v390 = vunpack.c.l.b16 %v357
    %v391 = vunpack.c.l.b16 %v358
    %v392 = vunpack.c.l.b16 %v359
    %v393 = vunpack.c.l.b16 %v360
    %v394 = vunpack.c.l.b16 %v361
    %v395 = vunpack.c.l.b16 %v362
    %v396 = vunpack.c.l.b16 %v363
    %v397 = vunpack.c.l.b16 %v364
    %v398 = vunpack.c.l.b16 %v365
    %v399 = vunpack.c.l.b16 %v366
    %v400 = vunpack.c.l.b16 %v367
    %v401 = vunpack.c.l.b16 %v368
    %v402 = vunpack.c.l.b16 %v369
    %v403 = vunpack.c.l.b16 %v370
    %v404 = vunpack.c.l.b16 %v371
    %v405 = vpack.c.b16 %v390, %v389
    %v406 = vpack.c.b16 %v392, %v391
    %v407 = vpack.c.b16 %v394, %v393
    %v408 = vpack.c.b16 %v396, %v395
    %v409 = vpack.c.b16 %v398, %v397
    %v410 = vpack.c.b16 %v400, %v399
    %v411 = vpack.c.b16 %v402, %v401
    %v412 = vpack.c.b16 %v404, %v403
    %421 = vmatpush.bf16.msra.mxu0 %v412
    %422 = vmatpush.bf16.msra.mxu0 %v411
    %423 = vmatpush.bf16.msra.mxu0 %v410
    %424 = vmatpush.bf16.msra.mxu0 %v409
    %425 = vmatpush.bf16.msra.mxu0 %v408
    %426 = vmatpush.bf16.msra.mxu0 %v407
    %427 = vmatpush.bf16.msra.mxu0 %v406
    %428 = vmatpush.bf16.msra.mxu0 %v405
    %429 = vmatmul.bf16.gmra.mxu0 %v354
    %v430 = vpop.f32.mrf.mxu0
    %v431 = vadd.f32 0.0, %v430
    %v432 = vpop.f32.mrf.mxu0
    %v433 = vadd.f32 0.0, %v432
    %434 = vdwg.mxu0
    %v435 = vperm.slane %v372, 0
    %436 = vmatpush.msra.mxu0 0.0
    %437 = vmatpush.msra.mxu0 0.0
    %438 = vmatpush.msra.mxu0 0.0
    %439 = vmatpush.msra.mxu0 0.0
    %440 = vmatpush.msra.mxu0 0.0
    %441 = vmatpush.msra.mxu0 0.0
    %442 = vmatpush.msra.mxu0 0.0
    %443 = vmatpush.msra.mxu0 0.0
    %444 = vmatpush.msra.mxu0 0.0
    %445 = vmatpush.msra.mxu0 0.0
    %446 = vmatpush.msra.mxu0 0.0
    %447 = vmatpush.msra.mxu0 0.0
    %448 = vmatpush.msra.mxu0 0.0
    %449 = vmatpush.msra.mxu0 0.0
    %450 = vmatpush.msra.mxu0 %v433
    %451 = vmatpush.msra.mxu0 %v431
    %452 = vmatmul.f32.gmra.mxu0 %v110
    %v453 = vpop.f32.mrf.mxu0
    %v454 = vadd.f32 %v435, %v453
    %455 = vmatmul.f32.gmra.mxu0 %v113
    %v456 = vpop.f32.mrf.mxu0
    %v457 = vadd.f32 %v435, %v456
    %458 = vdwg.mxu0
    %v459 = vtanh.pop %v454
    %v460 = vtanh.pop %v457
    %v461 = vpack.c.bf16 %v460, %v459
    %s462 = scalar_lea.vmem %s2, 256
    %v463 = vld [vmem:[%s462] sm:$0xf]
    %v464 = vld [vmem:[%s462 + $0x4] sm:$0xf]
    %v465 = vld [vmem:[%s462 + $0x8] sm:$0xf]
    %v466 = vld [vmem:[%s462 + $0xc] sm:$0xf]
    %v467 = vld [vmem:[%s462 + $0x10] sm:$0xf]
    %v468 = vld [vmem:[%s462 + $0x14] sm:$0xf]
    %v469 = vld [vmem:[%s462 + $0x18] sm:$0xf]
    %v470 = vld [vmem:[%s462 + $0x1c] sm:$0xf]
    %v471 = vld [vmem:[%s462 + $0x20] sm:$0xf]
    %v472 = vld [vmem:[%s462 + $0x24] sm:$0xf]
    %v473 = vld [vmem:[%s462 + $0x28] sm:$0xf]
    %v474 = vld [vmem:[%s462 + $0x2c] sm:$0xf]
    %v475 = vld [vmem:[%s462 + $0x30] sm:$0xf]
    %v476 = vld [vmem:[%s462 + $0x34] sm:$0xf]
    %v477 = vld [vmem:[%s462 + $0x38] sm:$0xf]
    %v478 = vld [vmem:[%s462 + $0x3c] sm:$0xf]
    %v479 = vld [vmem:[%s3 + $0x4] sm:$0x1]
    %v496 = vunpack.c.l.b16 %v463
    %v497 = vunpack.c.l.b16 %v464
    %v498 = vunpack.c.l.b16 %v465
    %v499 = vunpack.c.l.b16 %v466
    %v500 = vunpack.c.l.b16 %v467
    %v501 = vunpack.c.l.b16 %v468
    %v502 = vunpack.c.l.b16 %v469
    %v503 = vunpack.c.l.b16 %v470
    %v504 = vunpack.c.l.b16 %v471
    %v505 = vunpack.c.l.b16 %v472
    %v506 = vunpack.c.l.b16 %v473
    %v507 = vunpack.c.l.b16 %v474
    %v508 = vunpack.c.l.b16 %v475
    %v509 = vunpack.c.l.b16 %v476
    %v510 = vunpack.c.l.b16 %v477
    %v511 = vunpack.c.l.b16 %v478
    %v512 = vpack.c.b16 %v497, %v496
    %v513 = vpack.c.b16 %v499, %v498
    %v514 = vpack.c.b16 %v501, %v500
    %v515 = vpack.c.b16 %v503, %v502
    %v516 = vpack.c.b16 %v505, %v504
    %v517 = vpack.c.b16 %v507, %v506
    %v518 = vpack.c.b16 %v509, %v508
    %v519 = vpack.c.b16 %v511, %v510
    %528 = vmatpush.bf16.msra.mxu0 %v519
    %529 = vmatpush.bf16.msra.mxu0 %v518
    %530 = vmatpush.bf16.msra.mxu0 %v517
    %531 = vmatpush.bf16.msra.mxu0 %v516
    %532 = vmatpush.bf16.msra.mxu0 %v515
    %533 = vmatpush.bf16.msra.mxu0 %v514
    %534 = vmatpush.bf16.msra.mxu0 %v513
    %535 = vmatpush.bf16.msra.mxu0 %v512
    %536 = vmatmul.bf16.gmra.mxu0 %v461
    %v537 = vpop.f32.mrf.mxu0
    %v538 = vadd.f32 0.0, %v537
    %v539 = vpop.f32.mrf.mxu0
    %v540 = vadd.f32 0.0, %v539
    %541 = vdwg.mxu0
    %v542 = vperm.slane %v479, 0
    %543 = vmatpush.msra.mxu0 0.0
    %544 = vmatpush.msra.mxu0 0.0
    %545 = vmatpush.msra.mxu0 0.0
    %546 = vmatpush.msra.mxu0 0.0
    %547 = vmatpush.msra.mxu0 0.0
    %548 = vmatpush.msra.mxu0 0.0
    %549 = vmatpush.msra.mxu0 0.0
    %550 = vmatpush.msra.mxu0 0.0
    %551 = vmatpush.msra.mxu0 0.0
    %552 = vmatpush.msra.mxu0 0.0
    %553 = vmatpush.msra.mxu0 0.0
    %554 = vmatpush.msra.mxu0 0.0
    %555 = vmatpush.msra.mxu0 0.0
    %556 = vmatpush.msra.mxu0 0.0
    %557 = vmatpush.msra.mxu0 %v540
    %558 = vmatpush.msra.mxu0 %v538
    %559 = vmatmul.f32.gmra.mxu0 %v110
    %v560 = vpop.f32.mrf.mxu0
    %v561 = vadd.f32 %v542, %v560
    %562 = vmatmul.f32.gmra.mxu0 %v113
    %v563 = vpop.f32.mrf.mxu0
    %v564 = vadd.f32 %v542, %v563
    %565 = vdwg.mxu0
    %v566 = vtanh.pop %v561
    %v567 = vtanh.pop %v564
    %v568 = vpack.c.bf16 %v567, %v566
    %s569 = scalar_lea.vmem %s2, 320
    %v570 = vld [vmem:[%s569] sm:$0xf]
    %v571 = vld [vmem:[%s569 + $0x4] sm:$0xf]
    %v572 = vld [vmem:[%s569 + $0x8] sm:$0xf]
    %v573 = vld [vmem:[%s569 + $0xc] sm:$0xf]
    %v574 = vld [vmem:[%s569 + $0x10] sm:$0xf]
    %v575 = vld [vmem:[%s569 + $0x14] sm:$0xf]
    %v576 = vld [vmem:[%s569 + $0x18] sm:$0xf]
    %v577 = vld [vmem:[%s569 + $0x1c] sm:$0xf]
    %v578 = vld [vmem:[%s569 + $0x20] sm:$0xf]
    %v579 = vld [vmem:[%s569 + $0x24] sm:$0xf]
    %v580 = vld [vmem:[%s569 + $0x28] sm:$0xf]
    %v581 = vld [vmem:[%s569 + $0x2c] sm:$0xf]
    %v582 = vld [vmem:[%s569 + $0x30] sm:$0xf]
    %v583 = vld [vmem:[%s569 + $0x34] sm:$0xf]
    %v584 = vld [vmem:[%s569 + $0x38] sm:$0xf]
    %v585 = vld [vmem:[%s569 + $0x3c] sm:$0xf]
    %v586 = vld [vmem:[%s3 + $0x5] sm:$0x1]
    %v603 = vunpack.c.l.b16 %v570
    %v604 = vunpack.c.l.b16 %v571
    %v605 = vunpack.c.l.b16 %v572
    %v606 = vunpack.c.l.b16 %v573
    %v607 = vunpack.c.l.b16 %v574
    %v608 = vunpack.c.l.b16 %v575
    %v609 = vunpack.c.l.b16 %v576
    %v610 = vunpack.c.l.b16 %v577
    %v611 = vunpack.c.l.b16 %v578
    %v612 = vunpack.c.l.b16 %v579
    %v613 = vunpack.c.l.b16 %v580
    %v614 = vunpack.c.l.b16 %v581
    %v615 = vunpack.c.l.b16 %v582
    %v616 = vunpack.c.l.b16 %v583
    %v617 = vunpack.c.l.b16 %v584
    %v618 = vunpack.c.l.b16 %v585
    %v619 = vpack.c.b16 %v604, %v603
    %v620 = vpack.c.b16 %v606, %v605
    %v621 = vpack.c.b16 %v608, %v607
    %v622 = vpack.c.b16 %v610, %v609
    %v623 = vpack.c.b16 %v612, %v611
    %v624 = vpack.c.b16 %v614, %v613
    %v625 = vpack.c.b16 %v616, %v615
    %v626 = vpack.c.b16 %v618, %v617
    %635 = vmatpush.bf16.msra.mxu0 %v626
    %636 = vmatpush.bf16.msra.mxu0 %v625
    %637 = vmatpush.bf16.msra.mxu0 %v624
    %638 = vmatpush.bf16.msra.mxu0 %v623
    %639 = vmatpush.bf16.msra.mxu0 %v622
    %640 = vmatpush.bf16.msra.mxu0 %v621
    %641 = vmatpush.bf16.msra.mxu0 %v620
    %642 = vmatpush.bf16.msra.mxu0 %v619
    %643 = vmatmul.bf16.gmra.mxu0 %v568
    %v644 = vpop.f32.mrf.mxu0
    %v645 = vadd.f32 0.0, %v644
    %v646 = vpop.f32.mrf.mxu0
    %v647 = vadd.f32 0.0, %v646
    %648 = vdwg.mxu0
    %v649 = vperm.slane %v586, 0
    %650 = vmatpush.msra.mxu0 0.0
    %651 = vmatpush.msra.mxu0 0.0
    %652 = vmatpush.msra.mxu0 0.0
    %653 = vmatpush.msra.mxu0 0.0
    %654 = vmatpush.msra.mxu0 0.0
    %655 = vmatpush.msra.mxu0 0.0
    %656 = vmatpush.msra.mxu0 0.0
    %657 = vmatpush.msra.mxu0 0.0
    %658 = vmatpush.msra.mxu0 0.0
    %659 = vmatpush.msra.mxu0 0.0
    %660 = vmatpush.msra.mxu0 0.0
    %661 = vmatpush.msra.mxu0 0.0
    %662 = vmatpush.msra.mxu0 0.0
    %663 = vmatpush.msra.mxu0 0.0
    %664 = vmatpush.msra.mxu0 %v647
    %665 = vmatpush.msra.mxu0 %v645
    %666 = vmatmul.f32.gmra.mxu0 %v110
    %v667 = vpop.f32.mrf.mxu0
    %v668 = vadd.f32 %v649, %v667
    %669 = vmatmul.f32.gmra.mxu0 %v113
    %v670 = vpop.f32.mrf.mxu0
    %v671 = vadd.f32 %v649, %v670
    %672 = vdwg.mxu0
    %v673 = vtanh.pop %v668
    %v674 = vtanh.pop %v671
    %v675 = vpack.c.bf16 %v674, %v673
    %s676 = scalar_lea.vmem %s2, 384
    %v677 = vld [vmem:[%s676] sm:$0xf]
    %v678 = vld [vmem:[%s676 + $0x4] sm:$0xf]
    %v679 = vld [vmem:[%s676 + $0x8] sm:$0xf]
    %v680 = vld [vmem:[%s676 + $0xc] sm:$0xf]
    %v681 = vld [vmem:[%s676 + $0x10] sm:$0xf]
    %v682 = vld [vmem:[%s676 + $0x14] sm:$0xf]
    %v683 = vld [vmem:[%s676 + $0x18] sm:$0xf]
    %v684 = vld [vmem:[%s676 + $0x1c] sm:$0xf]
    %v685 = vld [vmem:[%s676 + $0x20] sm:$0xf]
    %v686 = vld [vmem:[%s676 + $0x24] sm:$0xf]
    %v687 = vld [vmem:[%s676 + $0x28] sm:$0xf]
    %v688 = vld [vmem:[%s676 + $0x2c] sm:$0xf]
    %v689 = vld [vmem:[%s676 + $0x30] sm:$0xf]
    %v690 = vld [vmem:[%s676 + $0x34] sm:$0xf]
    %v691 = vld [vmem:[%s676 + $0x38] sm:$0xf]
    %v692 = vld [vmem:[%s676 + $0x3c] sm:$0xf]
    %v693 = vld [vmem:[%s3 + $0x6] sm:$0x1]
    %v710 = vunpack.c.l.b16 %v677
    %v711 = vunpack.c.l.b16 %v678
    %v712 = vunpack.c.l.b16 %v679
    %v713 = vunpack.c.l.b16 %v680
    %v714 = vunpack.c.l.b16 %v681
    %v715 = vunpack.c.l.b16 %v682
    %v716 = vunpack.c.l.b16 %v683
    %v717 = vunpack.c.l.b16 %v684
    %v718 = vunpack.c.l.b16 %v685
    %v719 = vunpack.c.l.b16 %v686
    %v720 = vunpack.c.l.b16 %v687
    %v721 = vunpack.c.l.b16 %v688
    %v722 = vunpack.c.l.b16 %v689
    %v723 = vunpack.c.l.b16 %v690
    %v724 = vunpack.c.l.b16 %v691
    %v725 = vunpack.c.l.b16 %v692
    %v726 = vpack.c.b16 %v711, %v710
    %v727 = vpack.c.b16 %v713, %v712
    %v728 = vpack.c.b16 %v715, %v714
    %v729 = vpack.c.b16 %v717, %v716
    %v730 = vpack.c.b16 %v719, %v718
    %v731 = vpack.c.b16 %v721, %v720
    %v732 = vpack.c.b16 %v723, %v722
    %v733 = vpack.c.b16 %v725, %v724
    %742 = vmatpush.bf16.msra.mxu0 %v733
    %743 = vmatpush.bf16.msra.mxu0 %v732
    %744 = vmatpush.bf16.msra.mxu0 %v731
    %745 = vmatpush.bf16.msra.mxu0 %v730
    %746 = vmatpush.bf16.msra.mxu0 %v729
    %747 = vmatpush.bf16.msra.mxu0 %v728
    %748 = vmatpush.bf16.msra.mxu0 %v727
    %749 = vmatpush.bf16.msra.mxu0 %v726
    %750 = vmatmul.bf16.gmra.mxu0 %v675
    %v751 = vpop.f32.mrf.mxu0
    %v752 = vadd.f32 0.0, %v751
    %v753 = vpop.f32.mrf.mxu0
    %v754 = vadd.f32 0.0, %v753
    %755 = vdwg.mxu0
    %v756 = vperm.slane %v693, 0
    %757 = vmatpush.msra.mxu0 0.0
    %758 = vmatpush.msra.mxu0 0.0
    %759 = vmatpush.msra.mxu0 0.0
    %760 = vmatpush.msra.mxu0 0.0
    %761 = vmatpush.msra.mxu0 0.0
    %762 = vmatpush.msra.mxu0 0.0
    %763 = vmatpush.msra.mxu0 0.0
    %764 = vmatpush.msra.mxu0 0.0
    %765 = vmatpush.msra.mxu0 0.0
    %766 = vmatpush.msra.mxu0 0.0
    %767 = vmatpush.msra.mxu0 0.0
    %768 = vmatpush.msra.mxu0 0.0
    %769 = vmatpush.msra.mxu0 0.0
    %770 = vmatpush.msra.mxu0 0.0
    %771 = vmatpush.msra.mxu0 %v754
    %772 = vmatpush.msra.mxu0 %v752
    %773 = vmatmul.f32.gmra.mxu0 %v110
    %v774 = vpop.f32.mrf.mxu0
    %v775 = vadd.f32 %v756, %v774
    %776 = vmatmul.f32.gmra.mxu0 %v113
    %v777 = vpop.f32.mrf.mxu0
    %v778 = vadd.f32 %v756, %v777
    %779 = vdwg.mxu0
    %v780 = vtanh.pop %v775
    %v781 = vtanh.pop %v778
    %v782 = vpack.c.bf16 %v781, %v780
    %s783 = scalar_lea.vmem %s2, 448
    %v784 = vld [vmem:[%s783] sm:$0xf]
    %v785 = vld [vmem:[%s783 + $0x4] sm:$0xf]
    %v786 = vld [vmem:[%s783 + $0x8] sm:$0xf]
    %v787 = vld [vmem:[%s783 + $0xc] sm:$0xf]
    %v788 = vld [vmem:[%s783 + $0x10] sm:$0xf]
    %v789 = vld [vmem:[%s783 + $0x14] sm:$0xf]
    %v790 = vld [vmem:[%s783 + $0x18] sm:$0xf]
    %v791 = vld [vmem:[%s783 + $0x1c] sm:$0xf]
    %v792 = vld [vmem:[%s783 + $0x20] sm:$0xf]
    %v793 = vld [vmem:[%s783 + $0x24] sm:$0xf]
    %v794 = vld [vmem:[%s783 + $0x28] sm:$0xf]
    %v795 = vld [vmem:[%s783 + $0x2c] sm:$0xf]
    %v796 = vld [vmem:[%s783 + $0x30] sm:$0xf]
    %v797 = vld [vmem:[%s783 + $0x34] sm:$0xf]
    %v798 = vld [vmem:[%s783 + $0x38] sm:$0xf]
    %v799 = vld [vmem:[%s783 + $0x3c] sm:$0xf]
    %v800 = vld [vmem:[%s3 + $0x7] sm:$0x1]
    %v817 = vunpack.c.l.b16 %v784
    %v818 = vunpack.c.l.b16 %v785
    %v819 = vunpack.c.l.b16 %v786
    %v820 = vunpack.c.l.b16 %v787
    %v821 = vunpack.c.l.b16 %v788
    %v822 = vunpack.c.l.b16 %v789
    %v823 = vunpack.c.l.b16 %v790
    %v824 = vunpack.c.l.b16 %v791
    %v825 = vunpack.c.l.b16 %v792
    %v826 = vunpack.c.l.b16 %v793
    %v827 = vunpack.c.l.b16 %v794
    %v828 = vunpack.c.l.b16 %v795
    %v829 = vunpack.c.l.b16 %v796
    %v830 = vunpack.c.l.b16 %v797
    %v831 = vunpack.c.l.b16 %v798
    %v832 = vunpack.c.l.b16 %v799
    %v833 = vpack.c.b16 %v818, %v817
    %v834 = vpack.c.b16 %v820, %v819
    %v835 = vpack.c.b16 %v822, %v821
    %v836 = vpack.c.b16 %v824, %v823
    %v837 = vpack.c.b16 %v826, %v825
    %v838 = vpack.c.b16 %v828, %v827
    %v839 = vpack.c.b16 %v830, %v829
    %v840 = vpack.c.b16 %v832, %v831
    %849 = vmatpush.bf16.msra.mxu0 %v840
    %850 = vmatpush.bf16.msra.mxu0 %v839
    %851 = vmatpush.bf16.msra.mxu0 %v838
    %852 = vmatpush.bf16.msra.mxu0 %v837
    %853 = vmatpush.bf16.msra.mxu0 %v836
    %854 = vmatpush.bf16.msra.mxu0 %v835
    %855 = vmatpush.bf16.msra.mxu0 %v834
    %856 = vmatpush.bf16.msra.mxu0 %v833
    %857 = vmatmul.bf16.gmra.mxu0 %v782
    %v858 = vpop.f32.mrf.mxu0
    %v859 = vadd.f32 0.0, %v858
    %v860 = vpop.f32.mrf.mxu0
    %v861 = vadd.f32 0.0, %v860
    %862 = vdwg.mxu0
    %v863 = vperm.slane %v800, 0
    %864 = vmatpush.msra.mxu0 0.0
    %865 = vmatpush.msra.mxu0 0.0
    %866 = vmatpush.msra.mxu0 0.0
    %867 = vmatpush.msra.mxu0 0.0
    %868 = vmatpush.msra.mxu0 0.0
    %869 = vmatpush.msra.mxu0 0.0
    %870 = vmatpush.msra.mxu0 0.0
    %871 = vmatpush.msra.mxu0 0.0
    %872 = vmatpush.msra.mxu0 0.0
    %873 = vmatpush.msra.mxu0 0.0
    %874 = vmatpush.msra.mxu0 0.0
    %875 = vmatpush.msra.mxu0 0.0
    %876 = vmatpush.msra.mxu0 0.0
    %877 = vmatpush.msra.mxu0 0.0
    %878 = vmatpush.msra.mxu0 %v861
    %879 = vmatpush.msra.mxu0 %v859
    %880 = vmatmul.f32.gmra.mxu0 %v110
    %v881 = vpop.f32.mrf.mxu0
    %v882 = vadd.f32 %v863, %v881
    %883 = vmatmul.f32.gmra.mxu0 %v113
    %v884 = vpop.f32.mrf.mxu0
    %v885 = vadd.f32 %v863, %v884
    %886 = vdwg.mxu0
    %v887 = vtanh.pop %v882
    %v888 = vtanh.pop %v885
    %v889 = vpack.c.bf16 %v888, %v887
    %s890 = scalar_lea.vmem %s2, 512
    %v891 = vld [vmem:[%s890] sm:$0xf]
    %v892 = vld [vmem:[%s890 + $0x4] sm:$0xf]
    %v893 = vld [vmem:[%s890 + $0x8] sm:$0xf]
    %v894 = vld [vmem:[%s890 + $0xc] sm:$0xf]
    %v895 = vld [vmem:[%s890 + $0x10] sm:$0xf]
    %v896 = vld [vmem:[%s890 + $0x14] sm:$0xf]
    %v897 = vld [vmem:[%s890 + $0x18] sm:$0xf]
    %v898 = vld [vmem:[%s890 + $0x1c] sm:$0xf]
    %v899 = vld [vmem:[%s890 + $0x20] sm:$0xf]
    %v900 = vld [vmem:[%s890 + $0x24] sm:$0xf]
    %v901 = vld [vmem:[%s890 + $0x28] sm:$0xf]
    %v902 = vld [vmem:[%s890 + $0x2c] sm:$0xf]
    %v903 = vld [vmem:[%s890 + $0x30] sm:$0xf]
    %v904 = vld [vmem:[%s890 + $0x34] sm:$0xf]
    %v905 = vld [vmem:[%s890 + $0x38] sm:$0xf]
    %v906 = vld [vmem:[%s890 + $0x3c] sm:$0xf]
    %v907 = vld [vmem:[%s3 + $0x8] sm:$0x1]
    %v924 = vunpack.c.l.b16 %v891
    %v925 = vunpack.c.l.b16 %v892
    %v926 = vunpack.c.l.b16 %v893
    %v927 = vunpack.c.l.b16 %v894
    %v928 = vunpack.c.l.b16 %v895
    %v929 = vunpack.c.l.b16 %v896
    %v930 = vunpack.c.l.b16 %v897
    %v931 = vunpack.c.l.b16 %v898
    %v932 = vunpack.c.l.b16 %v899
    %v933 = vunpack.c.l.b16 %v900
    %v934 = vunpack.c.l.b16 %v901
    %v935 = vunpack.c.l.b16 %v902
    %v936 = vunpack.c.l.b16 %v903
    %v937 = vunpack.c.l.b16 %v904
    %v938 = vunpack.c.l.b16 %v905
    %v939 = vunpack.c.l.b16 %v906
    %v940 = vpack.c.b16 %v925, %v924
    %v941 = vpack.c.b16 %v927, %v926
    %v942 = vpack.c.b16 %v929, %v928
    %v943 = vpack.c.b16 %v931, %v930
    %v944 = vpack.c.b16 %v933, %v932
    %v945 = vpack.c.b16 %v935, %v934
    %v946 = vpack.c.b16 %v937, %v936
    %v947 = vpack.c.b16 %v939, %v938
    %956 = vmatpush.bf16.msra.mxu0 %v947
    %957 = vmatpush.bf16.msra.mxu0 %v946
    %958 = vmatpush.bf16.msra.mxu0 %v945
    %959 = vmatpush.bf16.msra.mxu0 %v944
    %960 = vmatpush.bf16.msra.mxu0 %v943
    %961 = vmatpush.bf16.msra.mxu0 %v942
    %962 = vmatpush.bf16.msra.mxu0 %v941
    %963 = vmatpush.bf16.msra.mxu0 %v940
    %964 = vmatmul.bf16.gmra.mxu0 %v889
    %v965 = vpop.f32.mrf.mxu0
    %v966 = vadd.f32 0.0, %v965
    %v967 = vpop.f32.mrf.mxu0
    %v968 = vadd.f32 0.0, %v967
    %969 = vdwg.mxu0
    %v970 = vperm.slane %v907, 0
    %971 = vmatpush.msra.mxu0 0.0
    %972 = vmatpush.msra.mxu0 0.0
    %973 = vmatpush.msra.mxu0 0.0
    %974 = vmatpush.msra.mxu0 0.0
    %975 = vmatpush.msra.mxu0 0.0
    %976 = vmatpush.msra.mxu0 0.0
    %977 = vmatpush.msra.mxu0 0.0
    %978 = vmatpush.msra.mxu0 0.0
    %979 = vmatpush.msra.mxu0 0.0
    %980 = vmatpush.msra.mxu0 0.0
    %981 = vmatpush.msra.mxu0 0.0
    %982 = vmatpush.msra.mxu0 0.0
    %983 = vmatpush.msra.mxu0 0.0
    %984 = vmatpush.msra.mxu0 0.0
    %985 = vmatpush.msra.mxu0 %v968
    %986 = vmatpush.msra.mxu0 %v966
    %987 = vmatmul.f32.gmra.mxu0 %v110
    %v988 = vpop.f32.mrf.mxu0
    %v989 = vadd.f32 %v970, %v988
    %990 = vmatmul.f32.gmra.mxu0 %v113
    %v991 = vpop.f32.mrf.mxu0
    %v992 = vadd.f32 %v970, %v991
    %993 = vdwg.mxu0
    %v994 = vtanh.pop %v989
    %v995 = vtanh.pop %v992
    %v996 = vlaneseq
    %v997 = vshrl.u32 %v996, 7
    %v998 = vadd.s32 %v997, 8
    %vm999 = vcmp.lt.s32.totalorder %v997, 8
    %vm1000 = vcmp.lt.s32.totalorder %v998, 8
    %v1001 = vsel %vm999, 0.125, 0.0
    %v1002 = vsel %vm1000, 0.125, 0.0
    %v1003 = vmul.f32 %v994, %v1001
    %v1004 = vmul.f32 %v995, %v1002
    %v1005 = vadd.f32 %v1003, %v1004
    %v1006 = vrot.slane %v1005, 4
    %v1007 = vadd.f32 %v1005, %v1006
    %v1008 = vrot.slane %v1007, 2
    %v1009 = vadd.f32 %v1007, %v1008
    %v1010 = vrot.slane %v1009, 1
    %v1011 = vadd.f32 %v1009, %v1010
    %v1012 = vpack.c.bf16 %v1011, %v1011
    %s1013 = scalar_lea.vmem %s2, 576
    %v1014 = vld [vmem:[%s1013] sm:$0xf]
    %v1015 = vld [vmem:[%s1013 + $0x4] sm:$0xf]
    %v1016 = vld [vmem:[%s1013 + $0x8] sm:$0xf]
    %v1017 = vld [vmem:[%s1013 + $0xc] sm:$0xf]
    %v1018 = vld [vmem:[%s1013 + $0x10] sm:$0xf]
    %v1019 = vld [vmem:[%s1013 + $0x14] sm:$0xf]
    %v1020 = vld [vmem:[%s1013 + $0x18] sm:$0xf]
    %v1021 = vld [vmem:[%s1013 + $0x1c] sm:$0xf]
    %v1022 = vld [vmem:[%s1013 + $0x20] sm:$0xf]
    %v1023 = vld [vmem:[%s1013 + $0x24] sm:$0xf]
    %v1024 = vld [vmem:[%s1013 + $0x28] sm:$0xf]
    %v1025 = vld [vmem:[%s1013 + $0x2c] sm:$0xf]
    %v1026 = vld [vmem:[%s1013 + $0x30] sm:$0xf]
    %v1027 = vld [vmem:[%s1013 + $0x34] sm:$0xf]
    %v1028 = vld [vmem:[%s1013 + $0x38] sm:$0xf]
    %v1029 = vld [vmem:[%s1013 + $0x3c] sm:$0xf]
    %v1030 = vld [vmem:[%s3 + $0x9] sm:$0x1]
    %v1047 = vunpack.c.l.b16 %v1014
    %v1048 = vunpack.c.l.b16 %v1015
    %v1049 = vunpack.c.l.b16 %v1016
    %v1050 = vunpack.c.l.b16 %v1017
    %v1051 = vunpack.c.l.b16 %v1018
    %v1052 = vunpack.c.l.b16 %v1019
    %v1053 = vunpack.c.l.b16 %v1020
    %v1054 = vunpack.c.l.b16 %v1021
    %v1055 = vunpack.c.l.b16 %v1022
    %v1056 = vunpack.c.l.b16 %v1023
    %v1057 = vunpack.c.l.b16 %v1024
    %v1058 = vunpack.c.l.b16 %v1025
    %v1059 = vunpack.c.l.b16 %v1026
    %v1060 = vunpack.c.l.b16 %v1027
    %v1061 = vunpack.c.l.b16 %v1028
    %v1062 = vunpack.c.l.b16 %v1029
    %v1063 = vpack.c.b16 %v1048, %v1047
    %v1064 = vpack.c.b16 %v1050, %v1049
    %v1065 = vpack.c.b16 %v1052, %v1051
    %v1066 = vpack.c.b16 %v1054, %v1053
    %v1067 = vpack.c.b16 %v1056, %v1055
    %v1068 = vpack.c.b16 %v1058, %v1057
    %v1069 = vpack.c.b16 %v1060, %v1059
    %v1070 = vpack.c.b16 %v1062, %v1061
    %1079 = vmatpush.bf16.msra.mxu0 %v1070
    %1080 = vmatpush.bf16.msra.mxu0 %v1069
    %1081 = vmatpush.bf16.msra.mxu0 %v1068
    %1082 = vmatpush.bf16.msra.mxu0 %v1067
    %1083 = vmatpush.bf16.msra.mxu0 %v1066
    %1084 = vmatpush.bf16.msra.mxu0 %v1065
    %1085 = vmatpush.bf16.msra.mxu0 %v1064
    %1086 = vmatpush.bf16.msra.mxu0 %v1063
    %1087 = vmatmul.bf16.gmra.mxu0 %v1012
    %v1088 = vpop.f32.mrf.mxu0
    %v1089 = vadd.f32 %v1030, %v1088
    %v1090 = vpop.f32.mrf.mxu0
    %1091 = vdwg.mxu0
    %v1092 = vtanh.pop %v1089
    %v1093 = vpack.c.bf16 %v1092, %v1092
    %s1094 = scalar_lea.vmem %s2, 640
    %v1095 = vld [vmem:[%s1094] sm:$0xf]
    %v1096 = vld [vmem:[%s1094 + $0x4] sm:$0xf]
    %v1097 = vld [vmem:[%s1094 + $0x8] sm:$0xf]
    %v1098 = vld [vmem:[%s1094 + $0xc] sm:$0xf]
    %v1099 = vld [vmem:[%s1094 + $0x10] sm:$0xf]
    %v1100 = vld [vmem:[%s1094 + $0x14] sm:$0xf]
    %v1101 = vld [vmem:[%s1094 + $0x18] sm:$0xf]
    %v1102 = vld [vmem:[%s1094 + $0x1c] sm:$0xf]
    %v1103 = vld [vmem:[%s1094 + $0x20] sm:$0xf]
    %v1104 = vld [vmem:[%s1094 + $0x24] sm:$0xf]
    %v1105 = vld [vmem:[%s1094 + $0x28] sm:$0xf]
    %v1106 = vld [vmem:[%s1094 + $0x2c] sm:$0xf]
    %v1107 = vld [vmem:[%s1094 + $0x30] sm:$0xf]
    %v1108 = vld [vmem:[%s1094 + $0x34] sm:$0xf]
    %v1109 = vld [vmem:[%s1094 + $0x38] sm:$0xf]
    %v1110 = vld [vmem:[%s1094 + $0x3c] sm:$0xf]
    %v1111 = vld [vmem:[%s3 + $0xa] sm:$0x1]
    %v1128 = vunpack.c.l.b16 %v1095
    %v1129 = vunpack.c.l.b16 %v1096
    %v1130 = vunpack.c.l.b16 %v1097
    %v1131 = vunpack.c.l.b16 %v1098
    %v1132 = vunpack.c.l.b16 %v1099
    %v1133 = vunpack.c.l.b16 %v1100
    %v1134 = vunpack.c.l.b16 %v1101
    %v1135 = vunpack.c.l.b16 %v1102
    %v1136 = vunpack.c.l.b16 %v1103
    %v1137 = vunpack.c.l.b16 %v1104
    %v1138 = vunpack.c.l.b16 %v1105
    %v1139 = vunpack.c.l.b16 %v1106
    %v1140 = vunpack.c.l.b16 %v1107
    %v1141 = vunpack.c.l.b16 %v1108
    %v1142 = vunpack.c.l.b16 %v1109
    %v1143 = vunpack.c.l.b16 %v1110
    %v1144 = vpack.c.b16 %v1129, %v1128
    %v1145 = vpack.c.b16 %v1131, %v1130
    %v1146 = vpack.c.b16 %v1133, %v1132
    %v1147 = vpack.c.b16 %v1135, %v1134
    %v1148 = vpack.c.b16 %v1137, %v1136
    %v1149 = vpack.c.b16 %v1139, %v1138
    %v1150 = vpack.c.b16 %v1141, %v1140
    %v1151 = vpack.c.b16 %v1143, %v1142
    %1160 = vmatpush.bf16.msra.mxu0 %v1151
    %1161 = vmatpush.bf16.msra.mxu0 %v1150
    %1162 = vmatpush.bf16.msra.mxu0 %v1149
    %1163 = vmatpush.bf16.msra.mxu0 %v1148
    %1164 = vmatpush.bf16.msra.mxu0 %v1147
    %1165 = vmatpush.bf16.msra.mxu0 %v1146
    %1166 = vmatpush.bf16.msra.mxu0 %v1145
    %1167 = vmatpush.bf16.msra.mxu0 %v1144
    %1168 = vmatmul.bf16.gmra.mxu0 %v1093
    %v1169 = vpop.f32.mrf.mxu0
    %v1170 = vadd.f32 %v1111, %v1169
    %v1171 = vpop.f32.mrf.mxu0
    %1172 = vdwg.mxu0
    %v1173 = vtanh.pop %v1170
    %1174 = vst [vmem:[#allocation2] sm:$0x1] %v1173
    // Predicated region
    $region18: #{gcn_forward.1} parent=1 // pred_check
      _
    $region19: #{gcn_forward.1} parent=1 // pred_check_branch
      %1176 = sbr.rel (0) target = $region21
    $region20: #{gcn_forward.1} parent=1 // pred_region
      %1178 = vsyncadd [#allocation3], 0
      %s1180 = sshll.u32 [#allocation2], 4
      %s1181 = int_to_ptr.vmem [resolvable:$true] %s1180
      %s1182 = sshll.u32 %s4, 4
      %s1183 = int_to_ptr.hbm [resolvable:$true] %s1182
      %1185 = dma.vmem_to_hbm [thread:$0]  %s1181, 16, %s1183, [#allocation3]
    $region21: #{gcn_forward.1} parent=1 // pred_fallthru
      _
    // Predicated region
    $region22: #{gcn_forward.1} parent=1 // pred_check
      _
    $region23: #{gcn_forward.1} parent=1 // pred_check_branch
      %1187 = sbr.rel (0) target = $region25
    $region24: #{gcn_forward.1} parent=1 // pred_region
      %1189 = dma.done [#allocation3], 16
    $region25: #{gcn_forward.1} parent=1 // pred_fallthru
      _
    %1190 = vsyncpa [#allocation3], 1

</llo_original>
